<compile_context>
chip_gen: v6e
topology: v6e:2x2x1
jax: 0.10.0
libtpu: 0.0.40
codegen_flags: <defaults>
</compile_context>

<pallas_src>
import numpy as np
import jax
import jax.numpy as jnp
from jax.experimental import pallas as pl
from jax.experimental.pallas import tpu as pltpu

_LANES = 128
_MIB = 1024 * 1024


# ----------------------------------------------------------------------------
# Shape resolution (torch-style view with a single -1 allowed)
# ----------------------------------------------------------------------------
def _resolve_shape(shape, total):
    shape = [int(s) for s in shape]
    if shape.count(-1) > 1:
        raise ValueError("only one -1 dimension is allowed")
    if -1 in shape:
        idx = shape.index(-1)
        known = 1
        for i, s in enumerate(shape):
            if i != idx:
                known *= s
        if known == 0 or total % known != 0:
            raise ValueError(
                f"cannot infer -1 for view shape {shape} with {total} elements")
        shape[idx] = total // known
    if int(np.prod(shape, dtype=np.int64)) != total:
        raise ValueError(f"view shape {shape} incompatible with {total} elements")
    return tuple(shape)


# ----------------------------------------------------------------------------
# Path 1: direct HBM -> HBM async copy (no VMEM round-trip)
# ----------------------------------------------------------------------------
def _hbm_copy_kernel(x_hbm, o_hbm, sem):
    cp = pltpu.make_async_copy(x_hbm, o_hbm, sem)
    cp.start()
    cp.wait()


def _pallas_dma_copy_reshape(x, out_shape):
    total = int(np.prod(x.shape, dtype=np.int64))
    itemsize = jnp.dtype(x.dtype).itemsize
    out = pl.pallas_call(
        _hbm_copy_kernel,
        out_shape=jax.ShapeDtypeStruct(x.shape, x.dtype),
        in_specs=[pl.BlockSpec(memory_space=pl.ANY)],
        out_specs=pl.BlockSpec(memory_space=pl.ANY),
        scratch_shapes=[pltpu.SemaphoreType.DMA],
        cost_estimate=pl.CostEstimate(
            flops=0, transcendentals=0, bytes_accessed=2 * total * itemsize),
    )(x)
    return out.reshape(out_shape)  # metadata-only


# ----------------------------------------------------------------------------
# Path 2: lane-dense tiled streaming copy through VMEM
# ----------------------------------------------------------------------------
def _copy_kernel(x_ref, o_ref):
    o_ref[...] = x_ref[...]


def _choose_layout(total, itemsize):
    """Pick a lane-dense (rows, cols) layout and a dtype-aware row tile.

    cols: largest multiple of 128 (<= 4096) dividing `total` -> unmasked
    stores, big contiguous DMA stripes, no padding.
    tile: ~4 MiB per tile so the double-buffered (2 in + 2 out) working set
    is ~16 MiB: above v5e's 16 MiB scoped default (we raise vmem_limit_bytes
    explicitly) and comfortably inside v7x's 64 MiB physical VMEM.
    """
    for cols in (4096, 2048, 1024, 512, 256, _LANES):
        if total % cols == 0:
            rows = total // cols
            break
    else:
        return None  # no factor of 128; caller uses the HBM->HBM DMA path

    # Sub-32-bit dtypes pack along sublanes: keep row tiles pack-aligned.
    pack = 8 * max(1, 4 // itemsize)
    if rows <= pack:
        return rows, cols, rows                       # single full-extent block

    target_tile_bytes = 4 * _MIB
    tile_rows = max(pack, (target_tile_bytes // (cols * itemsize)) // pack * pack)
    tile_rows = min(tile_rows, (rows // pack) * pack)

    # Guarantee >=2 grid steps so ("parallel",) shards across v7x's 2 TCs.
    if -(-rows // tile_rows) < 2:
        half = ((-(-rows // 2)) + pack - 1) // pack * pack
        tile_rows = max(pack, min(tile_rows, half))

    # Prefer a nearby tile_rows that divides rows exactly (no masked tail).
    if rows % tile_rows != 0:
        cand = tile_rows - pack
        lo = max(pack, tile_rows // 2)
        while cand >= lo:
            if rows % cand == 0:
                tile_rows = cand
                break
            cand -= pack

    return rows, cols, tile_rows


def _pallas_vmem_copy_reshape(x, out_shape):
    total = int(np.prod(x.shape, dtype=np.int64))
    itemsize = jnp.dtype(x.dtype).itemsize
    layout = _choose_layout(total, itemsize)
    if layout is None:
        # No multiple-of-128 factor: use the HBM->HBM DMA copy instead of
        # aliasing the input (explicit-copy contract is always honored).
        return _pallas_dma_copy_reshape(x, out_shape)

    rows, cols, tile_rows = layout
    x2d = x.reshape(rows, cols)                       # metadata-only

    tile_bytes = tile_rows * cols * itemsize
    # Cover 2x(in) + 2x(out) double buffers + headroom; clamp to a budget that
    # is safe on every chip (v5e scoped default 16 MiB, v7x physical 64 MiB).
    vmem_limit = int(min(48 * _MIB, max(32 * _MIB, 4 * tile_bytes + 8 * _MIB)))

    out2d = pl.pallas_call(
        _copy_kernel,
        out_shape=jax.ShapeDtypeStruct((rows, cols), x.dtype),
        grid=(pl.cdiv(rows, tile_rows),),
        in_specs=[pl.BlockSpec((tile_rows, cols), lambda i: (i, 0))],
        out_specs=pl.BlockSpec((tile_rows, cols), lambda i: (i, 0)),
        compiler_params=pltpu.CompilerParams(
            dimension_semantics=("parallel",),        # both TCs stream on v7x
            vmem_limit_bytes=vmem_limit),
        cost_estimate=pl.CostEstimate(
            flops=0, transcendentals=0, bytes_accessed=2 * total * itemsize),
    )(x2d)

    return out2d.reshape(out_shape)                   # metadata-only


# ----------------------------------------------------------------------------
# Public wrapper mirroring the nn.Module
# ----------------------------------------------------------------------------
def pallas_reshape(x, shape, copy=False, method="dma"):
    """Equivalent of torch `x.view(*shape)` for contiguous x."""
    total = int(np.prod(x.shape, dtype=np.int64))
    out_shape = _resolve_shape(shape, total)
    if total == 0 or not copy:
        # Contiguous view == metadata-only reinterpretation: zero HBM traffic.
        return x.reshape(out_shape)
    if method == "vmem":
        return _pallas_vmem_copy_reshape(x, out_shape)
    return _pallas_dma_copy_reshape(x, out_shape)


class ReshapePallas:
    """Mirror of the nn.Module: holds the target shape, applies it on call."""

    def __init__(self, shape, copy=False, method="dma"):
        self.shape = list(shape)
        self.copy = copy
        self.method = method

    def __call__(self, x):
        return pallas_reshape(x, self.shape, copy=self.copy, method=self.method)


if __name__ == "__main__":
    key = jax.random.PRNGKey(0)

    # Small NCHW-like input, consistent with typical PlaNet encoder usage:
    # flatten conv features per example -> Reshape([batch, -1]).
    x = jax.random.normal(key, (2, 4, 16, 16), dtype=jnp.float32)
    ref = x.reshape(2, -1)

    # 1) Default (metadata-only) path — exact torch .view semantics.
    y_fast = jax.block_until_ready(ReshapePallas([2, -1])(x))
    assert y_fast.shape == (2, 4 * 16 * 16) and y_fast.dtype == x.dtype
    np.testing.assert_array_equal(np.asarray(y_fast), np.asarray(ref))

    # 2) Explicit copy via direct HBM->HBM DMA (default copy path).
    y_dma = jax.block_until_ready(ReshapePallas([2, -1], copy=True)(x))
    assert y_dma.shape == ref.shape and y_dma.dtype == x.dtype
    np.testing.assert_array_equal(np.asarray(y_dma), np.asarray(ref))

    # 3) Explicit copy via the tiled VMEM streaming path (single-block case).
    y_vm = jax.block_until_ready(ReshapePallas([2, -1], copy=True, method="vmem")(x))
    np.testing.assert_array_equal(np.asarray(y_vm), np.asarray(ref))

    # 4) Multi-step grid on the VMEM path (rows > pack -> >=2 tiles, parallel).
    xm = jax.random.normal(jax.random.PRNGKey(0), (16, 4, 32, 32), dtype=jnp.float32)
    refm = xm.reshape(16, -1)
    ym = jax.block_until_ready(ReshapePallas([16, -1], copy=True, method="vmem")(xm))
    np.testing.assert_array_equal(np.asarray(ym), np.asarray(refm))

    # 5) bf16 case to exercise dtype-aware sublane packing in the VMEM path.
    xb = jax.random.normal(jax.random.PRNGKey(0), (8, 4, 32, 32), dtype=jnp.bfloat16)
    refb = xb.reshape(4, -1, 8)
    yb = jax.block_until_ready(ReshapePallas([4, -1, 8], copy=True, method="vmem")(xb))
    assert yb.shape == refb.shape and yb.dtype == xb.dtype
    np.testing.assert_array_equal(np.asarray(yb, dtype=np.float32),
                                  np.asarray(refb, dtype=np.float32))

    # 6) Total with no factor of 128: copy=True now does a real copy (DMA path)
    #    instead of silently aliasing the input.
    xo = jax.random.normal(jax.random.PRNGKey(0), (3, 5, 7), dtype=jnp.float32)
    refo = xo.reshape(21, 5)
    yo = jax.block_until_ready(ReshapePallas([21, 5], copy=True)(xo))
    np.testing.assert_array_equal(np.asarray(yo), np.asarray(refo))
    yo2 = jax.block_until_ready(ReshapePallas([21, 5], copy=True, method="vmem")(xo))
    np.testing.assert_array_equal(np.asarray(yo2), np.asarray(refo))

    print("KERNEL_OK")
</pallas_src>

<mosaic_0001>
module attributes {stable_mosaic.version = 11 : i64} {
  func.func @_hbm_copy_kernel(%arg0: memref<2x4x16x16xf32, #tpu.memory_space<any>>, %arg1: memref<2x4x16x16xf32, #tpu.memory_space<any>>, %arg2: memref<!tpu.dma_semaphore, #tpu.memory_space<semaphore_mem>>) attributes {dimension_semantics = [], scalar_prefetch = 0 : i64, scratch_operands = 1 : i64, tpu.core_type = #tpu.core_type<tc>} {
    tpu.enqueue_dma source(%arg0 : memref<2x4x16x16xf32, #tpu.memory_space<any>>) target(%arg1 : memref<2x4x16x16xf32, #tpu.memory_space<any>>) target_semaphore(%arg2 : memref<!tpu.dma_semaphore, #tpu.memory_space<semaphore_mem>>)
    tpu.wait_dma2 semaphore(%arg2 : memref<!tpu.dma_semaphore, #tpu.memory_space<semaphore_mem>>) src(%arg0 : memref<2x4x16x16xf32, #tpu.memory_space<any>>) dst(%arg1 : memref<2x4x16x16xf32, #tpu.memory_space<any>>)
    return
  }
}

</mosaic_0001>

<llo_original>
// kernel: tpu_custom_call.1
$region0: #{tpu_custom_call.1}
  #allocation0 [shape = 'u32[]', space=smem, size = 0x4, offset = 0x4, fixed_abs, tag = 'smem constant byte address 0x4 - core index']
  #allocation1 [shape = 'u32[144,128]{1,0:T(1,128)}', space=vmem, size = 0x12000, scoped, tag = 'internal scratch']
  #allocation2 [shape = 's32[1]{0}', space=sflag, size = 0x4, scoped, tag = 'scratch operand']
  #allocation3 [shape = 's32[]', space=sflag, size = 0x4, offset = 0, fixed_abs, tag = 'sflag constant byte address 0x0 - dummy sync flag']
  #allocation4 [shape = 'u32[0]{0}', space=smem, size = 0, offset = 0, fixed_abs, tag = 'smem constant byte address 0x0 - null']
  %s0 = inlined_call_operand.hbm [shape: f32[2,4,16,16], index: 0, kind: input, shape index: {}]
  %s1 = inlined_call_operand.hbm [shape: f32[2,4,16,16], index: 1, kind: output, shape index: {}]
  %s2 = sld [smem:[#allocation0]]
  $region2: #{tpu_custom_call.1} parent=0
    _
  %s4 = ssub.s32 1, %s2
  %s5 = scalar_select 0, %s4, %s2
  %s7 = sshll.u32 1, 14
  %s8 = sxor.u32 4294967295, %s7
  %12 = dma.general %s0, 2048, %s1, [#allocation2], 131072, [#allocation4], 0, 0
  %s13 = smul.u32 2, 4
  %s14 = smul.u32 %s13, 16
  %s15 = smul.u32 %s14, 1
  %s16 = sshll.u32 %s15, 4
  %17 = dma.done [#allocation2], %s16
  %18 = vsyncmov [#allocation2]
  %s19 = vpop.sfrf %18
  %p20 = scmp.eq.s32.totalorder %s19, 0
  %p21 = pneg %p20
  %23 = shalt.err (%p21)

</llo_original>
